<compile_context>
chip_gen: v7x
topology: tpu7x:2x2x1
jax: 0.10.0
libtpu: 0.0.40
codegen_flags: <defaults>
</compile_context>

<pallas_src>
import jax
import jax.numpy as jnp
from jax.experimental import pallas as pl
from jax.experimental.pallas import tpu as pltpu


# ---------------------------------------------------------------------------
# Kernels
# ---------------------------------------------------------------------------

def _row_norm_kernel(x_ref, gx_ref):
    """Pass 1: per-row L2 norm over channels. x_ref: (tile_n, C) -> gx_ref: (tile_n, 1)."""
    x = x_ref[...].astype(jnp.float32)
    gx_ref[...] = jnp.sqrt(jnp.sum(x * x, axis=1, keepdims=True))


def _apply_kernel(x_ref, nx_ref, gamma_ref, beta_ref, o_ref):
    """Pass 2: out = gamma * (x * Nx) + beta for one token tile."""
    x = x_ref[...].astype(jnp.float32)          # (tile_n, C)
    nx = nx_ref[...]                            # (tile_n, 1), f32
    gamma = gamma_ref[...].astype(jnp.float32)  # (1, C)
    beta = beta_ref[...].astype(jnp.float32)    # (1, C)
    o_ref[...] = (gamma * (x * nx) + beta).astype(o_ref.dtype)


# ---------------------------------------------------------------------------
# Wrapper
# ---------------------------------------------------------------------------

def _choose_tile_n(n, c, target_block_bytes=2 * 1024 * 1024, max_rows=1024):
    """Largest token tile (multiple of 8, or full N) with an f32 block <= target bytes."""
    if n <= 8:
        return n
    rows_by_vmem = max(8, target_block_bytes // (c * 4))
    tile = min(n, rows_by_vmem, max_rows)
    tile = max(8, (tile // 8) * 8)
    return n if tile >= n else tile


def grn_forward(x, gamma, beta, eps=1e-6, tile_n=None):
    """x: (N, C); gamma, beta: (1, C). Returns (N, C)."""
    n, c = x.shape
    if tile_n is None:
        tile_n = _choose_tile_n(n, c)
    grid_n = pl.cdiv(n, tile_n)

    # ---- Pass 1: per-row L2 norm (Gx), tiled over tokens ----
    gx = pl.pallas_call(
        _row_norm_kernel,
        out_shape=jax.ShapeDtypeStruct((n, 1), jnp.float32),
        grid_spec=pltpu.PrefetchScalarGridSpec(
            num_scalar_prefetch=0,
            grid=(grid_n,),
            in_specs=[pl.BlockSpec((tile_n, c), lambda i: (i, 0))],
            out_specs=pl.BlockSpec((tile_n, 1), lambda i: (i, 0)),
        ),
        compiler_params=pltpu.CompilerParams(
            dimension_semantics=("parallel",)),
    )(x)

    # ---- Global cross-tile reduction on the tiny (N, 1) intermediate ----
    # (exactly matches the reference: Nx = Gx / (mean(Gx) + eps))
    nx = gx / (jnp.mean(gx) + jnp.float32(eps))

    # ---- Pass 2: apply normalization + affine, tiled over tokens ----
    out = pl.pallas_call(
        _apply_kernel,
        out_shape=jax.ShapeDtypeStruct((n, c), x.dtype),
        grid_spec=pltpu.PrefetchScalarGridSpec(
            num_scalar_prefetch=0,
            grid=(grid_n,),
            in_specs=[
                pl.BlockSpec((tile_n, c), lambda i: (i, 0)),   # x tile
                pl.BlockSpec((tile_n, 1), lambda i: (i, 0)),   # Nx tile
                pl.BlockSpec((1, c), lambda i: (0, 0)),        # gamma (resident)
                pl.BlockSpec((1, c), lambda i: (0, 0)),        # beta  (resident)
            ],
            out_specs=pl.BlockSpec((tile_n, c), lambda i: (i, 0)),
        ),
        compiler_params=pltpu.CompilerParams(
            dimension_semantics=("parallel",)),
    )(x, nx, gamma, beta)
    return out


# ---------------------------------------------------------------------------
# Reference + demo
# ---------------------------------------------------------------------------

def grn_reference(x, gamma, beta, eps=1e-6):
    x32 = x.astype(jnp.float32)
    gx = jnp.linalg.norm(x32, ord=2, axis=1, keepdims=True)
    nx = gx / (jnp.mean(gx, axis=0, keepdims=True) + eps)
    out = gamma.astype(jnp.float32) * (x32 * nx) + beta.astype(jnp.float32)
    return out.astype(x.dtype)


if __name__ == "__main__":
    N, C = 64, 32          # small (tokens, dim) consistent with gamma/beta of shape (1, dim)
    key = jax.random.PRNGKey(0)
    kx, kg, kb = jax.random.split(key, 3)
    x = jax.random.normal(kx, (N, C), dtype=jnp.float32)

    # Parameters as in the module init (ones / zeros), perturbed deterministically
    # so the affine path is actually exercised.
    gamma = jnp.ones((1, C), dtype=jnp.float32) + 0.1 * jax.random.normal(kg, (1, C), jnp.float32)
    beta = jnp.zeros((1, C), dtype=jnp.float32) + 0.1 * jax.random.normal(kb, (1, C), jnp.float32)

    ref = grn_reference(x, gamma, beta)

    # Default (auto) tiling: whole N fits one tile here.
    out = jax.block_until_ready(grn_forward(x, gamma, beta))
    assert out.shape == (N, C)
    assert jnp.allclose(out, ref, atol=1e-5, rtol=1e-5), "mismatch vs reference (auto tile)"

    # Forced small tile to exercise the multi-tile / pipelined path (grid_n = 4).
    out_tiled = jax.block_until_ready(grn_forward(x, gamma, beta, tile_n=16))
    assert jnp.allclose(out_tiled, ref, atol=1e-5, rtol=1e-5), "mismatch vs reference (tiled)"

    print("KERNEL_OK")
</pallas_src>

<mosaic_0001>
module attributes {stable_mosaic.version = 11 : i64} {
  func.func @_row_norm_kernel(%arg0: i32, %arg1: memref<64x32xf32, #tpu.memory_space<vmem>>, %arg2: memref<64x1xf32, #tpu.memory_space<vmem>>) attributes {dimension_semantics = [#tpu.dimension_semantics<parallel>], iteration_bounds = array<i64: 1>, scalar_prefetch = 0 : i64, scratch_operands = 0 : i64, tpu.core_type = #tpu.core_type<tc>, window_params = [{transform_indices = @transform_0, window_bounds = array<i64: 64, 32>}, {transform_indices = @transform_1, window_bounds = array<i64: 64, 1>}]} {
    %c0 = arith.constant 0 : index
    %c0_0 = arith.constant 0 : index
    %0 = vector.load %arg1[%c0, %c0_0] : memref<64x32xf32, #tpu.memory_space<vmem>>, vector<64x32xf32>
    %1 = arith.mulf %0, %0 : vector<64x32xf32>
    %cst = arith.constant dense<0.000000e+00> : vector<64xf32>
    %2 = vector.multi_reduction <add>, %1, %cst [1] : vector<64x32xf32> to vector<64xf32>
    %3 = vector.shape_cast %2 : vector<64xf32> to vector<64x1xf32>
    %4 = math.sqrt %3 : vector<64x1xf32>
    %c0_1 = arith.constant 0 : index
    %c0_2 = arith.constant 0 : index
    %5 = vector.load %arg2[%c0_1, %c0_2] : memref<64x1xf32, #tpu.memory_space<vmem>>, vector<64x1xf32>
    tpu.vector_store %arg2[%c0_1, %c0_2], %4 {strides = array<i32>} : memref<64x1xf32, #tpu.memory_space<vmem>>, vector<64x1xf32>,
    return
  }
  func.func @transform_0(%arg0: i32) -> (i32, i32) {
    %c0_i32 = arith.constant 0 : i32
    %c0_i32_0 = arith.constant 0 : i32
    return %arg0, %c0_i32 : i32, i32
  }
  func.func @transform_1(%arg0: i32) -> (i32, i32) {
    %c0_i32 = arith.constant 0 : i32
    %c0_i32_0 = arith.constant 0 : i32
    return %arg0, %c0_i32 : i32, i32
  }
}

</mosaic_0001>

<llo_original>
// kernel: tpu_custom_call.1
$region0: #{tpu_custom_call.1}
  #allocation0 [shape = 'u32[]', space=smem, size = 0x4, offset = 0x4, fixed_abs, tag = 'smem constant byte address 0x4 - core index']
  #allocation1 [shape = 'u32[144,128]{1,0:T(1,128)}', space=vmem, size = 0x12000, scoped, tag = 'internal scratch']
  %s0 = inlined_call_operand.vmem [shape: f32[64,32], index: 0, kind: input, shape index: {}]
  %s1 = inlined_call_operand.vmem [shape: f32[64,1], index: 1, kind: output, shape index: {}]
  %s2 = sld [smem:[#allocation0]]
  $region14: #{tpu_custom_call.1} parent=0
    _
  %s4 = ssub.s32 1, %s2
  %s5 = scalar_select 0, %s4, %s2
  // Predicated region
  $region2: #{tpu_custom_call.1} parent=0 // pred_check
    _
  $region3: #{tpu_custom_call.1} parent=0 // pred_check_branch
    %7 = sbr.rel (0) target = $region5
  $region4: #{tpu_custom_call.1} parent=0 // pred_region
    _
  $region5: #{tpu_custom_call.1} parent=0 // pred_fallthru
    _
  %v8 = vld [vmem:[%s0] sm:$0xff]
  %v9 = vld [vmem:[%s0 + $0x8] sm:$0xff]
  %v10 = vld [vmem:[%s0 + $0x10] sm:$0xff]
  %v11 = vld [vmem:[%s0 + $0x18] sm:$0xff]
  %v12 = vld [vmem:[%s0 + $0x20] sm:$0xff]
  %v13 = vld [vmem:[%s0 + $0x28] sm:$0xff]
  %v14 = vld [vmem:[%s0 + $0x30] sm:$0xff]
  %v15 = vld [vmem:[%s0 + $0x38] sm:$0xff]
  %v16 = vmul.f32 %v8, %v8
  %v17 = vmul.f32 %v9, %v9
  %v18 = vmul.f32 %v10, %v10
  %v19 = vmul.f32 %v11, %v11
  %v20 = vmul.f32 %v12, %v12
  %v21 = vmul.f32 %v13, %v13
  %v22 = vmul.f32 %v14, %v14
  %v23 = vmul.f32 %v15, %v15
  %vm24 = vcmask 261120
  %v25 = vsel %vm24, %v16, 0.0
  %26 = vadd.xlane.f32.xlu0 %v25
  %v27 = vpop.xlane.xlu0 %26
  %v28 = vsel %vm24, %v17, 0.0
  %29 = vadd.xlane.f32.xlu0 %v28
  %v30 = vpop.xlane.xlu0 %29
  %v31 = vsel %vm24, %v18, 0.0
  %32 = vadd.xlane.f32.xlu0 %v31
  %v33 = vpop.xlane.xlu0 %32
  %v34 = vsel %vm24, %v19, 0.0
  %35 = vadd.xlane.f32.xlu0 %v34
  %v36 = vpop.xlane.xlu0 %35
  %v37 = vsel %vm24, %v20, 0.0
  %38 = vadd.xlane.f32.xlu0 %v37
  %v39 = vpop.xlane.xlu0 %38
  %v40 = vsel %vm24, %v21, 0.0
  %41 = vadd.xlane.f32.xlu0 %v40
  %v42 = vpop.xlane.xlu0 %41
  %v43 = vsel %vm24, %v22, 0.0
  %44 = vadd.xlane.f32.xlu0 %v43
  %v45 = vpop.xlane.xlu0 %44
  %v46 = vsel %vm24, %v23, 0.0
  %47 = vadd.xlane.f32.xlu0 %v46
  %v48 = vpop.xlane.xlu0 %47
  %v49 = vrsqrt.pop %v27
  %v50 = vmul.f32 %v27, %v49
  %vm51 = vcmp.eq.f32.partialorder %v27, inf
  %v52 = vsel %vm51, %v27, %v50
  %vm53 = vcmp.eq.f32.partialorder %v27, 0.0
  %v54 = vand.u32 %v27, 2147483648
  %v55 = vsel %vm53, %v54, %v52
  %v56 = vrsqrt.pop %v30
  %v57 = vmul.f32 %v30, %v56
  %vm58 = vcmp.eq.f32.partialorder %v30, inf
  %v59 = vsel %vm58, %v30, %v57
  %vm60 = vcmp.eq.f32.partialorder %v30, 0.0
  %v61 = vand.u32 %v30, 2147483648
  %v62 = vsel %vm60, %v61, %v59
  %v63 = vrsqrt.pop %v33
  %v64 = vmul.f32 %v33, %v63
  %vm65 = vcmp.eq.f32.partialorder %v33, inf
  %v66 = vsel %vm65, %v33, %v64
  %vm67 = vcmp.eq.f32.partialorder %v33, 0.0
  %v68 = vand.u32 %v33, 2147483648
  %v69 = vsel %vm67, %v68, %v66
  %v70 = vrsqrt.pop %v36
  %v71 = vmul.f32 %v36, %v70
  %vm72 = vcmp.eq.f32.partialorder %v36, inf
  %v73 = vsel %vm72, %v36, %v71
  %vm74 = vcmp.eq.f32.partialorder %v36, 0.0
  %v75 = vand.u32 %v36, 2147483648
  %v76 = vsel %vm74, %v75, %v73
  %v77 = vrsqrt.pop %v39
  %v78 = vmul.f32 %v39, %v77
  %vm79 = vcmp.eq.f32.partialorder %v39, inf
  %v80 = vsel %vm79, %v39, %v78
  %vm81 = vcmp.eq.f32.partialorder %v39, 0.0
  %v82 = vand.u32 %v39, 2147483648
  %v83 = vsel %vm81, %v82, %v80
  %v84 = vrsqrt.pop %v42
  %v85 = vmul.f32 %v42, %v84
  %vm86 = vcmp.eq.f32.partialorder %v42, inf
  %v87 = vsel %vm86, %v42, %v85
  %vm88 = vcmp.eq.f32.partialorder %v42, 0.0
  %v89 = vand.u32 %v42, 2147483648
  %v90 = vsel %vm88, %v89, %v87
  %v91 = vrsqrt.pop %v45
  %v92 = vmul.f32 %v45, %v91
  %vm93 = vcmp.eq.f32.partialorder %v45, inf
  %v94 = vsel %vm93, %v45, %v92
  %vm95 = vcmp.eq.f32.partialorder %v45, 0.0
  %v96 = vand.u32 %v45, 2147483648
  %v97 = vsel %vm95, %v96, %v94
  %v98 = vrsqrt.pop %v48
  %v99 = vmul.f32 %v48, %v98
  %vm100 = vcmp.eq.f32.partialorder %v48, inf
  %v101 = vsel %vm100, %v48, %v99
  %vm102 = vcmp.eq.f32.partialorder %v48, 0.0
  %v103 = vand.u32 %v48, 2147483648
  %v104 = vsel %vm102, %v103, %v101
  %vm105 = vcmask 7168
  %106 = vst.msk [vmem:[%s1] sm:$0xff] %vm105, %v55
  %107 = vst.msk [vmem:[%s1 + $0x8] sm:$0xff] %vm105, %v62
  %108 = vst.msk [vmem:[%s1 + $0x10] sm:$0xff] %vm105, %v69
  %109 = vst.msk [vmem:[%s1 + $0x18] sm:$0xff] %vm105, %v76
  %110 = vst.msk [vmem:[%s1 + $0x20] sm:$0xff] %vm105, %v83
  %111 = vst.msk [vmem:[%s1 + $0x28] sm:$0xff] %vm105, %v90
  %112 = vst.msk [vmem:[%s1 + $0x30] sm:$0xff] %vm105, %v97
  %113 = vst.msk [vmem:[%s1 + $0x38] sm:$0xff] %vm105, %v104
  // Predicated region
  $region6: #{tpu_custom_call.1} parent=0 // pred_check
    _
  $region7: #{tpu_custom_call.1} parent=0 // pred_check_branch
    %115 = sbr.rel (0) target = $region9
  $region8: #{tpu_custom_call.1} parent=0 // pred_region
    _
  $region9: #{tpu_custom_call.1} parent=0 // pred_fallthru
    _
  // Predicated region
  $region10: #{tpu_custom_call.1} parent=0 // pred_check
    _
  $region11: #{tpu_custom_call.1} parent=0 // pred_check_branch
    %117 = sbr.rel (0) target = $region13
  $region12: #{tpu_custom_call.1} parent=0 // pred_region
    _
  $region13: #{tpu_custom_call.1} parent=0 // pred_fallthru
    _

</llo_original>
